<compile_context>
chip_gen: v5e
topology: v5e:2x2
jax: 0.10.0
libtpu: 0.0.40
codegen_flags: <defaults>
</compile_context>

<pallas_src>
import jax
import jax.numpy as jnp
from jax.experimental import pallas as pl
from jax.experimental.pallas import tpu as pltpu

IN_FEATURES = 21 * 2   # 42
H1 = 64
H2 = 32
OUT_FEATURES = 16

# Batch rows packed per lane-dense row group: 8 * 16 = 128 output lanes (1 vreg row),
# 8 * 42 = 336 input lanes (87.5% lane utilization vs 42/128 = 33% unpacked).
PACK = 8

# Below this many rows the launch/step overhead dominates; keep grid=().
SMALL_BATCH_THRESHOLD = 1024
# Rows per grid step in the tiled path (multiple of PACK*8 = 64).  At 16384 rows the
# per-step HBM bytes (~3.8 MB) dominate the ~0.35us step overhead on every generation.
DEFAULT_TILE_BATCH = 16384
# Explicit scoped-VMEM budget: above v5e's 16 MiB / v6e-v7x's 32 MiB defaults, below
# v7x's 64 MiB physical.  Estimated peak at the default tile is ~20 MiB.
VMEM_LIMIT_BYTES = 48 * 1024 * 1024


def _mlp_kernel(x_ref, w1_ref, b1_ref, w2_ref, b2_ref, w3_ref, b3_ref, o_ref):
    """Fused 3-layer MLP on one batch tile: relu(relu(x@W1+b1)@W2+b2)@W3+b3.

    Works unchanged for both the plain layout (features 42/64/32/16) and the
    row-packed layout (features 336/512/256/128).  All math is f32; the MXU
    accumulates in f32 via preferred_element_type.
    """
    h = jnp.dot(x_ref[...], w1_ref[...], preferred_element_type=jnp.float32)
    h = jnp.maximum(h + b1_ref[...], 0.0)
    h = jnp.dot(h, w2_ref[...], preferred_element_type=jnp.float32)
    h = jnp.maximum(h + b2_ref[...], 0.0)
    h = jnp.dot(h, w3_ref[...], preferred_element_type=jnp.float32)
    o_ref[...] = (h + b3_ref[...]).astype(o_ref.dtype)


def _forward_small(y, params, out_dtype):
    """Latency path: whole problem is a few KB; single full-extent block, grid=()."""
    B = y.shape[0]
    full_spec = lambda shape: pl.BlockSpec(shape, lambda: (0,) * len(shape))
    return pl.pallas_call(
        _mlp_kernel,
        out_shape=jax.ShapeDtypeStruct((B, OUT_FEATURES), out_dtype),
        grid=(),
        in_specs=[
            full_spec((B, IN_FEATURES)),
            full_spec((IN_FEATURES, H1)),
            full_spec((1, H1)),
            full_spec((H1, H2)),
            full_spec((1, H2)),
            full_spec((H2, OUT_FEATURES)),
            full_spec((1, OUT_FEATURES)),
        ],
        out_specs=full_spec((B, OUT_FEATURES)),
    )(y.astype(jnp.float32),
      params["w1"], params["b1"], params["w2"], params["b2"],
      params["w3"], params["b3"])


def _forward_tiled(y, params, tile_batch, out_dtype):
    """Throughput path: row-packed lane-dense layout, batch-tiled pipelined grid,
    VMEM-resident weights, f32 end-to-end."""
    B = y.shape[0]

    # Per-step tile: multiple of PACK*8 rows (8 sublanes of packed row groups).
    row_group = PACK * 8
    tb = max(row_group, (int(tile_batch) // row_group) * row_group)
    tbp = tb // PACK                                   # packed row groups per step

    # Pad only when B is not a multiple of PACK (<= 7 rows); otherwise the packed
    # reshape below is a free row-major view and no slice is needed afterwards.
    B8 = pl.cdiv(B, PACK) * PACK
    if B8 != B:
        y = jnp.pad(y, ((0, B8 - B), (0, 0)))
    G = B8 // PACK
    xp = y.reshape(G, PACK * IN_FEATURES)              # (G, 336), free view

    if G <= tbp:
        tbp = G                                        # one full-extent block
    num_tiles = pl.cdiv(G, tbp)                        # ragged last block masked by Pallas

    # Block-diagonal "packed" weights: kron(I_8, W) so 8 independent batch rows share
    # one lane-dense row.  Built once per call (tiny; constant-folded under jit).
    eye = jnp.eye(PACK, dtype=jnp.float32)
    w1p = jnp.kron(eye, params["w1"].astype(jnp.float32))      # (336, 512)
    w2p = jnp.kron(eye, params["w2"].astype(jnp.float32))      # (512, 256)
    w3p = jnp.kron(eye, params["w3"].astype(jnp.float32))      # (256, 128)
    b1p = jnp.tile(params["b1"].astype(jnp.float32), (1, PACK))  # (1, 512)
    b2p = jnp.tile(params["b2"].astype(jnp.float32), (1, PACK))  # (1, 256)
    b3p = jnp.tile(params["b3"].astype(jnp.float32), (1, PACK))  # (1, 128)

    resident = lambda shape: pl.BlockSpec(shape, lambda i: (0, 0))

    outp = pl.pallas_call(
        _mlp_kernel,
        out_shape=jax.ShapeDtypeStruct((G, PACK * OUT_FEATURES), out_dtype),
        grid=(num_tiles,),
        in_specs=[
            pl.BlockSpec((tbp, PACK * IN_FEATURES), lambda i: (i, 0)),   # streamed x
            resident((PACK * IN_FEATURES, PACK * H1)),
            resident((1, PACK * H1)),
            resident((PACK * H1, PACK * H2)),
            resident((1, PACK * H2)),
            resident((PACK * H2, PACK * OUT_FEATURES)),
            resident((1, PACK * OUT_FEATURES)),
        ],
        out_specs=pl.BlockSpec((tbp, PACK * OUT_FEATURES), lambda i: (i, 0)),
        compiler_params=pltpu.CompilerParams(
            dimension_semantics=("parallel",),          # megacore split on v7x
            vmem_limit_bytes=VMEM_LIMIT_BYTES,
        ),
    )(xp, w1p, b1p, w2p, b2p, w3p, b3p)

    out = outp.reshape(B8, OUT_FEATURES)               # free row-major view
    if B8 != B:
        out = out[:B]                                  # only when we actually padded
    return out


def sign_classifier_forward(x, params, *, tile_batch=None, out_dtype=jnp.float32):
    """x: any shape that flattens to (-1, 42); params: dict of (in,out) weights / (1,out) biases.

    tile_batch=None -> auto dispatch (small-batch full-block path below the threshold,
    packed/tiled path above).  Passing tile_batch forces the tiled path with that tile.
    out_dtype=jnp.bfloat16 halves output HBM traffic if downstream tolerates it
    (default f32 matches the PyTorch module).
    """
    y = x.reshape(-1, IN_FEATURES)
    B = y.shape[0]
    if tile_batch is None and B <= SMALL_BATCH_THRESHOLD:
        return _forward_small(y, params, out_dtype)
    tb = DEFAULT_TILE_BATCH if tile_batch is None else tile_batch
    return _forward_tiled(y, params, tb, out_dtype)


def init_params(key):
    """Deterministic synthetic init (Kaiming-uniform-like, matching nn.Linear shapes)."""
    ks = jax.random.split(key, 6)

    def linear(kw, kb, fan_in, fan_out):
        bound = 1.0 / jnp.sqrt(fan_in)
        # Stored as (in, out) == transpose of PyTorch's (out, in) weight.
        w = jax.random.uniform(kw, (fan_in, fan_out), jnp.float32, -bound, bound)
        b = jax.random.uniform(kb, (1, fan_out), jnp.float32, -bound, bound)
        return w, b

    w1, b1 = linear(ks[0], ks[1], IN_FEATURES, H1)
    w2, b2 = linear(ks[2], ks[3], H1, H2)
    w3, b3 = linear(ks[4], ks[5], H2, OUT_FEATURES)
    return {"w1": w1, "b1": b1, "w2": w2, "b2": b2, "w3": w3, "b3": b3}


def _reference(x, p):
    hi = jax.lax.Precision.HIGHEST
    y = x.reshape(-1, IN_FEATURES).astype(jnp.float32)
    h = jnp.maximum(jnp.dot(y, p["w1"], precision=hi) + p["b1"], 0.0)
    h = jnp.maximum(jnp.dot(h, p["w2"], precision=hi) + p["b2"], 0.0)
    return jnp.dot(h, p["w3"], precision=hi) + p["b3"]


if __name__ == "__main__":
    key = jax.random.PRNGKey(0)
    k1, k2, k3, k4, kp = jax.random.split(key, 5)
    params = init_params(kp)

    # 1) Small / real-time path: 8 hands, 21 landmarks x 2 coords, grid=().
    x_small = jax.random.normal(k1, (8, 21, 2), jnp.float32)
    out_small = jax.block_until_ready(sign_classifier_forward(x_small, params))
    assert out_small.shape == (8, OUT_FEATURES)
    assert jnp.allclose(out_small, _reference(x_small, params), atol=1e-4, rtol=1e-4), \
        "small-path mismatch vs reference"

    # 2) Tiled path, divisible batch (no pad, no slice): 256 rows, 128-row tile -> 2 steps.
    x_div = jax.random.normal(k2, (256, 21, 2), jnp.float32)
    out_div = jax.block_until_ready(
        sign_classifier_forward(x_div, params, tile_batch=128))
    assert out_div.shape == (256, OUT_FEATURES)
    assert jnp.allclose(out_div, _reference(x_div, params), atol=1e-4, rtol=1e-4), \
        "tiled-path (divisible) mismatch vs reference"

    # 3) Tiled path, ragged batch: 300 rows -> minimal pad to 304, 38 row groups,
    #    3 grid steps with a partial last block handled by Pallas boundary masking.
    x_rag = jax.random.normal(k3, (300, 21, 2), jnp.float32)
    out_rag = jax.block_until_ready(
        sign_classifier_forward(x_rag, params, tile_batch=128))
    assert out_rag.shape == (300, OUT_FEATURES)
    assert jnp.allclose(out_rag, _reference(x_rag, params), atol=1e-4, rtol=1e-4), \
        "tiled-path (ragged) mismatch vs reference"

    # 4) Auto-dispatch tiled path (B > threshold) with the default tile
    #    (clamped to a single full-extent block at this small test size).
    x_auto = jax.random.normal(k4, (2048, 21, 2), jnp.float32)
    out_auto = jax.block_until_ready(sign_classifier_forward(x_auto, params))
    assert out_auto.shape == (2048, OUT_FEATURES)
    assert jnp.allclose(out_auto, _reference(x_auto, params), atol=1e-4, rtol=1e-4), \
        "tiled-path (auto) mismatch vs reference"

    print("KERNEL_OK")
</pallas_src>

<mosaic_0001>
module attributes {stable_mosaic.version = 11 : i64} {
  func.func @_mlp_kernel(%arg0: memref<8x42xf32, #tpu.memory_space<vmem>>, %arg1: memref<42x64xf32, #tpu.memory_space<vmem>>, %arg2: memref<1x64xf32, #tpu.memory_space<vmem>>, %arg3: memref<64x32xf32, #tpu.memory_space<vmem>>, %arg4: memref<1x32xf32, #tpu.memory_space<vmem>>, %arg5: memref<32x16xf32, #tpu.memory_space<vmem>>, %arg6: memref<1x16xf32, #tpu.memory_space<vmem>>, %arg7: memref<8x16xf32, #tpu.memory_space<vmem>>) attributes {dimension_semantics = [], scalar_prefetch = 0 : i64, scratch_operands = 0 : i64, tpu.core_type = #tpu.core_type<tc>} {
    %c0 = arith.constant 0 : index
    %c0_0 = arith.constant 0 : index
    %0 = vector.load %arg0[%c0, %c0_0] : memref<8x42xf32, #tpu.memory_space<vmem>>, vector<8x42xf32>
    %c0_1 = arith.constant 0 : index
    %c0_2 = arith.constant 0 : index
    %1 = vector.load %arg1[%c0_1, %c0_2] : memref<42x64xf32, #tpu.memory_space<vmem>>, vector<42x64xf32>
    %cst = arith.constant dense<0.000000e+00> : vector<8x64xf32>
    %2 = tpu.matmul %0, %1, %cst {dimension_numbers = #tpu.dot_dimension_numbers<[1], [0], [0], [1], [0, 0, 1, 1], [], []>} : vector<8x42xf32>, vector<42x64xf32>, vector<8x64xf32> -> vector<8x64xf32>
    %c0_3 = arith.constant 0 : index
    %c0_4 = arith.constant 0 : index
    %3 = vector.load %arg2[%c0_3, %c0_4] : memref<1x64xf32, #tpu.memory_space<vmem>>, vector<1x64xf32>
    %4 = vector.broadcast %3 : vector<1x64xf32> to vector<8x64xf32>
    %5 = arith.addf %2, %4 : vector<8x64xf32>
    %cst_5 = arith.constant 0.000000e+00 : f32
    %6 = vector.broadcast %cst_5 : f32 to vector<8x64xf32>
    %7 = arith.maximumf %5, %6 : vector<8x64xf32>
    %c0_6 = arith.constant 0 : index
    %c0_7 = arith.constant 0 : index
    %8 = vector.load %arg3[%c0_6, %c0_7] : memref<64x32xf32, #tpu.memory_space<vmem>>, vector<64x32xf32>
    %cst_8 = arith.constant dense<0.000000e+00> : vector<8x32xf32>
    %9 = tpu.matmul %7, %8, %cst_8 {dimension_numbers = #tpu.dot_dimension_numbers<[1], [0], [0], [1], [0, 0, 1, 1], [], []>} : vector<8x64xf32>, vector<64x32xf32>, vector<8x32xf32> -> vector<8x32xf32>
    %c0_9 = arith.constant 0 : index
    %c0_10 = arith.constant 0 : index
    %10 = vector.load %arg4[%c0_9, %c0_10] : memref<1x32xf32, #tpu.memory_space<vmem>>, vector<1x32xf32>
    %11 = vector.broadcast %10 : vector<1x32xf32> to vector<8x32xf32>
    %12 = arith.addf %9, %11 : vector<8x32xf32>
    %cst_11 = arith.constant 0.000000e+00 : f32
    %13 = vector.broadcast %cst_11 : f32 to vector<8x32xf32>
    %14 = arith.maximumf %12, %13 : vector<8x32xf32>
    %c0_12 = arith.constant 0 : index
    %c0_13 = arith.constant 0 : index
    %15 = vector.load %arg5[%c0_12, %c0_13] : memref<32x16xf32, #tpu.memory_space<vmem>>, vector<32x16xf32>
    %cst_14 = arith.constant dense<0.000000e+00> : vector<8x16xf32>
    %16 = tpu.matmul %14, %15, %cst_14 {dimension_numbers = #tpu.dot_dimension_numbers<[1], [0], [0], [1], [0, 0, 1, 1], [], []>} : vector<8x32xf32>, vector<32x16xf32>, vector<8x16xf32> -> vector<8x16xf32>
    %c0_15 = arith.constant 0 : index
    %c0_16 = arith.constant 0 : index
    %17 = vector.load %arg6[%c0_15, %c0_16] : memref<1x16xf32, #tpu.memory_space<vmem>>, vector<1x16xf32>
    %18 = vector.broadcast %17 : vector<1x16xf32> to vector<8x16xf32>
    %19 = arith.addf %16, %18 : vector<8x16xf32>
    %c0_17 = arith.constant 0 : index
    %c0_18 = arith.constant 0 : index
    %20 = vector.load %arg7[%c0_17, %c0_18] : memref<8x16xf32, #tpu.memory_space<vmem>>, vector<8x16xf32>
    tpu.vector_store %arg7[%c0_17, %c0_18], %19 {strides = array<i32>} : memref<8x16xf32, #tpu.memory_space<vmem>>, vector<8x16xf32>,
    return
  }
}

</mosaic_0001>

<llo_original>
// kernel: tpu_custom_call.1
$region0: #{tpu_custom_call.1}
  #allocation0 [shape = 'u32[]', space=smem, size = 0x4, offset = 0x4, fixed_abs, tag = 'smem constant byte address 0x4 - core index']
  #allocation1 [shape = 'u32[72,128]{1,0:T(1,128)}', space=vmem, size = 0x9000, scoped, tag = 'internal scratch']
  %s0 = inlined_call_operand.vmem [shape: f32[8,42], index: 0, kind: input, shape index: {}]
  %s1 = inlined_call_operand.vmem [shape: f32[42,64], index: 1, kind: input, shape index: {}]
  %s2 = inlined_call_operand.vmem [shape: f32[1,64], index: 2, kind: input, shape index: {}]
  %s3 = inlined_call_operand.vmem [shape: f32[64,32], index: 3, kind: input, shape index: {}]
  %s4 = inlined_call_operand.vmem [shape: f32[1,32], index: 4, kind: input, shape index: {}]
  %s5 = inlined_call_operand.vmem [shape: f32[32,16], index: 5, kind: input, shape index: {}]
  %s6 = inlined_call_operand.vmem [shape: f32[1,16], index: 6, kind: input, shape index: {}]
  %s7 = inlined_call_operand.hbm [shape: f32[8,16], index: 7, kind: output, shape index: {}]
  %s8 = sld [smem:[#allocation0]]
  $region38: #{tpu_custom_call.1} parent=0
    _
  %s10 = ssub.s32 1, %s8
  %s11 = scalar_select 0, %s10, %s8
  $region1: #{tpu_custom_call.1} parent=0
    #allocation2 [shape = 'u8[4096]{0}', space=vmem, size = 0x1000, scoped, tag = 'output window, operand 0, single buffered']
    #allocation3 [shape = 's32[1]{0}', space=sflag, size = 0x4, scoped, tag = 'scoped memory for tpu_custom_call.1']
    %12 = vsyncpa [#allocation3], 0
    // Predicated region
    $region2: #{tpu_custom_call.1} parent=1 // pred_check
      _
    $region3: #{tpu_custom_call.1} parent=1 // pred_check_branch
      %14 = sbr.rel (0) target = $region5
    $region4: #{tpu_custom_call.1} parent=1 // pred_region
      _
    $region5: #{tpu_custom_call.1} parent=1 // pred_fallthru
      _
    // Predicated region
    $region6: #{tpu_custom_call.1} parent=1 // pred_check
      _
    $region7: #{tpu_custom_call.1} parent=1 // pred_check_branch
      %16 = sbr.rel (0) target = $region9
    $region8: #{tpu_custom_call.1} parent=1 // pred_region
      _
    $region9: #{tpu_custom_call.1} parent=1 // pred_fallthru
      _
    // Predicated region
    $region10: #{tpu_custom_call.1} parent=1 // pred_check
      _
    $region11: #{tpu_custom_call.1} parent=1 // pred_check_branch
      %18 = sbr.rel (0) target = $region13
    $region12: #{tpu_custom_call.1} parent=1 // pred_region
      _
    $region13: #{tpu_custom_call.1} parent=1 // pred_fallthru
      _
    // Predicated region
    $region14: #{tpu_custom_call.1} parent=1 // pred_check
      _
    $region15: #{tpu_custom_call.1} parent=1 // pred_check_branch
      %20 = sbr.rel (0) target = $region17
    $region16: #{tpu_custom_call.1} parent=1 // pred_region
      _
    $region17: #{tpu_custom_call.1} parent=1 // pred_fallthru
      _
    // Predicated region
    $region18: #{tpu_custom_call.1} parent=1 // pred_check
      _
    $region19: #{tpu_custom_call.1} parent=1 // pred_check_branch
      %22 = sbr.rel (0) target = $region21
    $region20: #{tpu_custom_call.1} parent=1 // pred_region
      _
    $region21: #{tpu_custom_call.1} parent=1 // pred_fallthru
      _
    // Predicated region
    $region22: #{tpu_custom_call.1} parent=1 // pred_check
      _
    $region23: #{tpu_custom_call.1} parent=1 // pred_check_branch
      %24 = sbr.rel (0) target = $region25
    $region24: #{tpu_custom_call.1} parent=1 // pred_region
      _
    $region25: #{tpu_custom_call.1} parent=1 // pred_fallthru
      _
    // Predicated region
    $region26: #{tpu_custom_call.1} parent=1 // pred_check
      _
    $region27: #{tpu_custom_call.1} parent=1 // pred_check_branch
      %26 = sbr.rel (0) target = $region29
    $region28: #{tpu_custom_call.1} parent=1 // pred_region
      _
    $region29: #{tpu_custom_call.1} parent=1 // pred_fallthru
      _
    %v27 = vld [vmem:[%s0] sm:$0xff]
    %v28 = vld [vmem:[%s1] sm:$0xff]
    %v29 = vld [vmem:[%s1 + $0x8] sm:$0xff]
    %v30 = vld [vmem:[%s1 + $0x10] sm:$0xff]
    %v31 = vld [vmem:[%s1 + $0x18] sm:$0xff]
    %v32 = vld [vmem:[%s1 + $0x20] sm:$0xff]
    %v33 = vld [vmem:[%s1 + $0x28] sm:$0x3]
    %v34 = vld [vmem:[%s2] sm:$0x1]
    %v36 = vperm.slane %v34, 0
    %vm38 = vcmask 343040
    %v40 = vsel %vm38, %v27, 0
    %vm42 = vcmask 1041408
    %v44 = vsel %vm42, %v33, 0
    %46 = vmatpush.msra.mxu0 0.0
    %47 = vmatpush.msra.mxu0 0.0
    %48 = vmatpush.msra.mxu0 0.0
    %49 = vmatpush.msra.mxu0 0.0
    %50 = vmatpush.msra.mxu0 0.0
    %51 = vmatpush.msra.mxu0 0.0
    %52 = vmatpush.msra.mxu0 0.0
    %53 = vmatpush.msra.mxu0 0.0
    %54 = vmatpush.msra.mxu0 0.0
    %55 = vmatpush.msra.mxu0 0.0
    %56 = vmatpush.msra.mxu0 %v44
    %57 = vmatpush.msra.mxu0 %v32
    %58 = vmatpush.msra.mxu0 %v31
    %59 = vmatpush.msra.mxu0 %v30
    %60 = vmatpush.msra.mxu0 %v29
    %61 = vmatpush.msra.mxu0 %v28
    %62 = vmatmul.f32.gmra.mxu0 %v40
    %v63 = vpop.f32.mrf.mxu0
    %v64 = vadd.f32 %v36, %v63
    %65 = vdwg.mxu0
    %v66 = vmax.f32 %v64, 0.0
    %v67 = vld [vmem:[%s3] sm:$0xff]
    %v68 = vld [vmem:[%s3 + $0x8] sm:$0xff]
    %v69 = vld [vmem:[%s3 + $0x10] sm:$0xff]
    %v70 = vld [vmem:[%s3 + $0x18] sm:$0xff]
    %v71 = vld [vmem:[%s3 + $0x20] sm:$0xff]
    %v72 = vld [vmem:[%s3 + $0x28] sm:$0xff]
    %v73 = vld [vmem:[%s3 + $0x30] sm:$0xff]
    %v74 = vld [vmem:[%s3 + $0x38] sm:$0xff]
    %v75 = vld [vmem:[%s4] sm:$0x1]
    %v77 = vperm.slane %v75, 0
    %vm79 = vcmask 523264
    %v81 = vsel %vm79, %v66, 0
    %83 = vmatpush.msra.mxu0 0.0
    %84 = vmatpush.msra.mxu0 0.0
    %85 = vmatpush.msra.mxu0 0.0
    %86 = vmatpush.msra.mxu0 0.0
    %87 = vmatpush.msra.mxu0 0.0
    %88 = vmatpush.msra.mxu0 0.0
    %89 = vmatpush.msra.mxu0 0.0
    %90 = vmatpush.msra.mxu0 0.0
    %91 = vmatpush.msra.mxu0 %v74
    %92 = vmatpush.msra.mxu0 %v73
    %93 = vmatpush.msra.mxu0 %v72
    %94 = vmatpush.msra.mxu0 %v71
    %95 = vmatpush.msra.mxu0 %v70
    %96 = vmatpush.msra.mxu0 %v69
    %97 = vmatpush.msra.mxu0 %v68
    %98 = vmatpush.msra.mxu0 %v67
    %99 = vmatmul.f32.gmra.mxu0 %v81
    %v100 = vpop.f32.mrf.mxu0
    %v101 = vadd.f32 %v77, %v100
    %102 = vdwg.mxu0
    %v103 = vmax.f32 %v101, 0.0
    %v104 = vld [vmem:[%s5] sm:$0xff]
    %v105 = vld [vmem:[%s5 + $0x8] sm:$0xff]
    %v106 = vld [vmem:[%s5 + $0x10] sm:$0xff]
    %v107 = vld [vmem:[%s5 + $0x18] sm:$0xff]
    %v108 = vld [vmem:[%s6] sm:$0x1]
    %v110 = vperm.slane %v108, 0
    %vm112 = vcmask 261120
    %v114 = vsel %vm112, %v103, 0
    %116 = vmatpush.msra.mxu0 0.0
    %117 = vmatpush.msra.mxu0 0.0
    %118 = vmatpush.msra.mxu0 0.0
    %119 = vmatpush.msra.mxu0 0.0
    %120 = vmatpush.msra.mxu0 0.0
    %121 = vmatpush.msra.mxu0 0.0
    %122 = vmatpush.msra.mxu0 0.0
    %123 = vmatpush.msra.mxu0 0.0
    %124 = vmatpush.msra.mxu0 0.0
    %125 = vmatpush.msra.mxu0 0.0
    %126 = vmatpush.msra.mxu0 0.0
    %127 = vmatpush.msra.mxu0 0.0
    %128 = vmatpush.msra.mxu0 %v107
    %129 = vmatpush.msra.mxu0 %v106
    %130 = vmatpush.msra.mxu0 %v105
    %131 = vmatpush.msra.mxu0 %v104
    %132 = vmatmul.f32.gmra.mxu0 %v114
    %v133 = vpop.f32.mrf.mxu0
    %v134 = vadd.f32 %v110, %v133
    %135 = vdwg.mxu0
    %vm136 = vcmask 130048
    %137 = vst.msk [vmem:[#allocation2] sm:$0xff] %vm136, %v134
    // Predicated region
    $region30: #{tpu_custom_call.1} parent=1 // pred_check
      _
    $region31: #{tpu_custom_call.1} parent=1 // pred_check_branch
      %139 = sbr.rel (0) target = $region33
    $region32: #{tpu_custom_call.1} parent=1 // pred_region
      %141 = vsyncadd [#allocation3], 0
      %s143 = sshll.u32 [#allocation2], 4
      %s144 = int_to_ptr.vmem [resolvable:$true] %s143
      %s145 = sshll.u32 %s7, 4
      %s146 = int_to_ptr.hbm [resolvable:$true] %s145
      %148 = dma.vmem_to_hbm [thread:$0]  %s144, 128, %s146, [#allocation3]
    $region33: #{tpu_custom_call.1} parent=1 // pred_fallthru
      _
    // Predicated region
    $region34: #{tpu_custom_call.1} parent=1 // pred_check
      _
    $region35: #{tpu_custom_call.1} parent=1 // pred_check_branch
      %150 = sbr.rel (0) target = $region37
    $region36: #{tpu_custom_call.1} parent=1 // pred_region
      %152 = dma.done [#allocation3], 128
    $region37: #{tpu_custom_call.1} parent=1 // pred_fallthru
      _
    %153 = vsyncpa [#allocation3], 1

</llo_original>
